<compile_context>
chip_gen: v6e
topology: v6e:2x2x1
jax: 0.10.0
libtpu: 0.0.40
codegen_flags: <defaults>
</compile_context>

<pallas_src>
import jax
import jax.numpy as jnp
import numpy as np
from jax import lax
from jax.experimental import pallas as pl
from jax.experimental.pallas import tpu as pltpu


def _round_up(x, m):
    return (x + m - 1) // m * m


def _fused_block_kernel(p_ref, w_ref, b_ref, o_ref):
    # p_ref: (tm, Kp)  im2col patches (bf16/f32, lane-dense)
    # w_ref: (Kp, Cp)  combined (conv3x3*BN + shortcut) weight (bf16/f32)
    # b_ref: (1,  Cp)  combined bias (f32, added after f32 accumulation)
    # o_ref: (tm, Cp)  lane-dense f32 output tile
    acc = jnp.dot(p_ref[...], w_ref[...], preferred_element_type=jnp.float32)
    o_ref[...] = jnp.maximum(acc + b_ref[...], 0.0).astype(o_ref.dtype)


_VMEM_BUDGET = 48 * 1024 * 1024      # fits v7x's 64 MiB physical VMEM w/ headroom
_VMEM_LIMIT_CAP = 56 * 1024 * 1024   # never ask for more than v7x can give


def _pick_tm(M, Kp, Cp, in_bytes):
    """Pick the M-tile size from a VMEM budget; return (tm, vmem_limit_bytes)."""
    # Per-step VMEM: patches (double-buffered) + weight & bias (constant
    # index_map -> DMA'd once, but conservatively count 2 buffers for the
    # allocation) + f32 output (double-buffered).
    fixed = 2 * Kp * Cp * in_bytes + 2 * Cp * 4
    tm = 128
    for cand in (1024, 512, 256, 128):
        if fixed + 2 * cand * (Kp * in_bytes + Cp * 4) <= _VMEM_BUDGET:
            tm = cand
            break
    # Keep >=4 grid steps when M allows: 2 TCs (v7x megacore) x >=2 pipelined
    # steps each.  tm stays a multiple of 16 (bf16 sublane packing).
    while tm > 16 and (M + tm - 1) // tm < 4:
        tm //= 2
    vmem_used = fixed + 2 * tm * (Kp * in_bytes + Cp * 4)
    vmem_limit = min(max(vmem_used + (8 << 20), 32 << 20), _VMEM_LIMIT_CAP)
    return tm, vmem_limit


def basic_module_forward(x, params, stride, *, compute_dtype=jnp.bfloat16,
                         data_format="NCHW"):
    """Forward pass of BasicModule (BatchNorm in eval / running-stats mode).

    compute_dtype=bfloat16 (default) feeds the MXU its native operand dtype on
    v5e/v6e/v7x; accumulation stays f32 (preferred_element_type).  Pass
    jnp.float32 for bit-tight numerics at ~half MXU throughput.
    data_format="NHWC" accepts/returns NHWC and skips both layout transposes
    (use when chaining blocks so activations stay NHWC end-to-end).
    """
    eps = 1e-5
    w3_oihw = params["w3"]                       # (Cout, Cin, 3, 3)
    if data_format == "NCHW":
        x_nhwc = jnp.transpose(x, (0, 2, 3, 1))
    else:
        x_nhwc = x
    N, H, W, Cin = x_nhwc.shape
    Cout = w3_oihw.shape[0]
    use_proj = (stride != 1) or (Cin != Cout)
    Hout = (H + 2 - 3) // stride + 1
    Wout = (W + 2 - 3) // stride + 1

    # ---- wrapper-side layout: cast to compute dtype, 1px halo pad, im2col ----
    # (cast BEFORE im2col so the materialized 9x patch matrix is half-width;
    #  allow_input_fusion below additionally lets XLA fuse this producer into
    #  the pallas_call operand DMA instead of a separate HBM round trip)
    x_c = x_nhwc.astype(compute_dtype)
    x_pad = jnp.pad(x_c, ((0, 0), (1, 1), (1, 1), (0, 0)))
    Hs = (Hout - 1) * stride + 1
    Ws = (Wout - 1) * stride + 1
    taps = [x_pad[:, kh:kh + Hs:stride, kw:kw + Ws:stride, :]
            for kh in range(3) for kw in range(3)]
    patches = jnp.concatenate(taps, axis=-1)     # (N, Hout, Wout, 9*Cin)
    K = 9 * Cin
    M = N * Hout * Wout
    patches = patches.reshape(M, K)

    # ---- fold BN (eval) + shortcut into one (K, Cout) weight + bias, in f32 ----
    s_m = params["bn_gamma"] / jnp.sqrt(params["bn_var"] + eps)
    b_m = params["bn_beta"] - params["bn_mean"] * s_m
    w3_hwio = jnp.transpose(w3_oihw, (2, 3, 1, 0)).astype(jnp.float32)
    w_comb = (w3_hwio * s_m[None, None, None, :]).reshape(K, Cout)

    if use_proj:
        s_s = params["bn1_gamma"] / jnp.sqrt(params["bn1_var"] + eps)
        b_s = params["bn1_beta"] - params["bn1_mean"] * s_s
        w1 = jnp.transpose(params["w1"][:, :, 0, 0], (1, 0)).astype(jnp.float32)
        w_center = w1 * s_s[None, :]
    else:
        b_s = jnp.zeros((Cout,), jnp.float32)
        w_center = jnp.eye(Cin, Cout, dtype=jnp.float32)   # identity shortcut
    # shortcut input == centre tap (kh=1, kw=1) of the im2col patch matrix
    w_comb = w_comb.at[4 * Cin:5 * Cin, :].add(w_center)
    bias = (b_m + b_s).astype(jnp.float32)

    # ---- lane-dense channel padding + VMEM-budgeted M tiling ----
    Cp = _round_up(Cout, 128)                    # lane-dense output stores
    Kp = _round_up(K, 128)                       # lane-dense patch loads
    in_bytes = int(np.dtype(compute_dtype).itemsize)
    tm, vmem_limit = _pick_tm(M, Kp, Cp, in_bytes)
    Mp = _round_up(M, tm)

    patches = jnp.pad(patches, ((0, Mp - M), (0, Kp - K)))        # compute_dtype
    w_comb = jnp.pad(w_comb, ((0, Kp - K), (0, Cp - Cout))).astype(compute_dtype)
    bias = jnp.pad(bias, (0, Cp - Cout)).reshape(1, Cp)           # stays f32

    grid = (Mp // tm,)
    cost = pl.CostEstimate(
        flops=2 * Mp * Kp * Cp,
        transcendentals=0,
        bytes_accessed=(Mp * Kp * in_bytes + Kp * Cp * in_bytes
                        + Cp * 4 + Mp * Cp * 4),
    )

    out = pl.pallas_call(
        _fused_block_kernel,
        out_shape=jax.ShapeDtypeStruct((Mp, Cp), jnp.float32),
        grid_spec=pltpu.PrefetchScalarGridSpec(
            num_scalar_prefetch=0,
            grid=grid,
            in_specs=[
                pl.BlockSpec((tm, Kp), lambda i: (i, 0)),
                # weight/bias: constant index_map -> DMA'd once, kept resident
                # across all grid steps (allocation counted in the VMEM budget).
                pl.BlockSpec((Kp, Cp), lambda i: (0, 0)),
                pl.BlockSpec((1, Cp), lambda i: (0, 0)),
            ],
            out_specs=pl.BlockSpec((tm, Cp), lambda i: (i, 0)),
        ),
        compiler_params=pltpu.CompilerParams(
            dimension_semantics=("parallel",),
            vmem_limit_bytes=vmem_limit,
            # allow XLA to fuse the im2col producer into the patches operand
            allow_input_fusion=[True, False, False],
        ),
        cost_estimate=cost,
    )(patches, w_comb, bias)

    # strip row/channel padding
    out = out[:M, :Cout].reshape(N, Hout, Wout, Cout)
    if data_format == "NCHW":
        out = jnp.transpose(out, (0, 3, 1, 2))
    return out


def reference_forward(x_nchw, params, stride):
    """Pure-JAX (lax.conv) reference mirroring the PyTorch forward (BN eval mode)."""
    eps = 1e-5
    dn = ("NCHW", "OIHW", "NCHW")
    Cout = params["w3"].shape[0]
    Cin = x_nchw.shape[1]
    use_proj = (stride != 1) or (Cin != Cout)

    out = lax.conv_general_dilated(x_nchw, params["w3"], (stride, stride),
                                   ((1, 1), (1, 1)), dimension_numbers=dn)
    g = params["bn_gamma"][None, :, None, None]
    b = params["bn_beta"][None, :, None, None]
    m = params["bn_mean"][None, :, None, None]
    v = params["bn_var"][None, :, None, None]
    out = (out - m) / jnp.sqrt(v + eps) * g + b

    if use_proj:
        sc = lax.conv_general_dilated(x_nchw, params["w1"], (stride, stride),
                                      ((0, 0), (0, 0)), dimension_numbers=dn)
        g1 = params["bn1_gamma"][None, :, None, None]
        b1 = params["bn1_beta"][None, :, None, None]
        m1 = params["bn1_mean"][None, :, None, None]
        v1 = params["bn1_var"][None, :, None, None]
        sc = (sc - m1) / jnp.sqrt(v1 + eps) * g1 + b1
    else:
        sc = x_nchw
    return jnp.maximum(out + sc, 0.0)


def make_params(key, in_channels, out_channels, use_proj):
    ks = jax.random.split(key, 10)
    p = {
        "w3": jax.random.normal(ks[0], (out_channels, in_channels, 3, 3),
                                jnp.float32) * 0.1,
        "bn_gamma": jax.random.uniform(ks[1], (out_channels,), jnp.float32, 0.5, 1.5),
        "bn_beta": jax.random.normal(ks[2], (out_channels,), jnp.float32) * 0.1,
        "bn_mean": jax.random.normal(ks[3], (out_channels,), jnp.float32) * 0.1,
        "bn_var": jax.random.uniform(ks[4], (out_channels,), jnp.float32, 0.5, 1.5),
    }
    if use_proj:
        p.update({
            "w1": jax.random.normal(ks[5], (out_channels, in_channels, 1, 1),
                                    jnp.float32) * 0.1,
            "bn1_gamma": jax.random.uniform(ks[6], (out_channels,), jnp.float32, 0.5, 1.5),
            "bn1_beta": jax.random.normal(ks[7], (out_channels,), jnp.float32) * 0.1,
            "bn1_mean": jax.random.normal(ks[8], (out_channels,), jnp.float32) * 0.1,
            "bn1_var": jax.random.uniform(ks[9], (out_channels,), jnp.float32, 0.5, 1.5),
        })
    return p


if __name__ == "__main__":
    key = jax.random.PRNGKey(0)
    kx, kp1, kp2 = jax.random.split(key, 3)

    N, Cin, H, W = 2, 4, 16, 16
    x = jax.random.normal(kx, (N, Cin, H, W), jnp.float32)

    # Case 1: projection shortcut (stride=2, Cin=4 -> Cout=8)
    params_proj = make_params(kp1, Cin, 8, use_proj=True)
    # Case 2: identity shortcut (stride=1, Cin == Cout == 4)
    params_id = make_params(kp2, Cin, Cin, use_proj=False)

    # ---- exact-math check: f32 operands, tight tolerance ----
    y = jax.block_until_ready(
        basic_module_forward(x, params_proj, stride=2, compute_dtype=jnp.float32))
    np.testing.assert_allclose(np.asarray(y),
                               np.asarray(reference_forward(x, params_proj, stride=2)),
                               rtol=1e-4, atol=1e-4)

    y = jax.block_until_ready(
        basic_module_forward(x, params_id, stride=1, compute_dtype=jnp.float32))
    np.testing.assert_allclose(np.asarray(y),
                               np.asarray(reference_forward(x, params_id, stride=1)),
                               rtol=1e-4, atol=1e-4)

    # ---- performance-default path: bf16 operands, f32 accumulation ----
    # (looser tolerance: operands are rounded to bf16, accumulation stays f32)
    y = jax.block_until_ready(basic_module_forward(x, params_proj, stride=2))
    np.testing.assert_allclose(np.asarray(y),
                               np.asarray(reference_forward(x, params_proj, stride=2)),
                               rtol=5e-2, atol=5e-2)

    y = jax.block_until_ready(basic_module_forward(x, params_id, stride=1))
    np.testing.assert_allclose(np.asarray(y),
                               np.asarray(reference_forward(x, params_id, stride=1)),
                               rtol=5e-2, atol=5e-2)

    print("KERNEL_OK")
</pallas_src>

<mosaic_0001>
module attributes {stable_mosaic.version = 11 : i64} {
  func.func @_fused_block_kernel(%arg0: i32, %arg1: memref<32x128xf32, #tpu.memory_space<vmem>>, %arg2: memref<128x128xf32, #tpu.memory_space<vmem>>, %arg3: memref<1x128xf32, #tpu.memory_space<vmem>>, %arg4: memref<32x128xf32, #tpu.memory_space<vmem>>) attributes {dimension_semantics = [#tpu.dimension_semantics<parallel>], iteration_bounds = array<i64: 4>, scalar_prefetch = 0 : i64, scratch_operands = 0 : i64, tpu.core_type = #tpu.core_type<tc>, window_params = [{transform_indices = @transform_0, window_bounds = array<i64: 32, 128>}, {pipeline_mode = #tpu.pipeline_mode<synchronous>, transform_indices = @transform_1, window_bounds = array<i64: 128, 128>}, {pipeline_mode = #tpu.pipeline_mode<synchronous>, transform_indices = @transform_2, window_bounds = array<i64: 1, 128>}, {transform_indices = @transform_3, window_bounds = array<i64: 32, 128>}]} {
    %c0 = arith.constant 0 : index
    %c0_0 = arith.constant 0 : index
    %0 = vector.load %arg1[%c0, %c0_0] : memref<32x128xf32, #tpu.memory_space<vmem>>, vector<32x128xf32>
    %c0_1 = arith.constant 0 : index
    %c0_2 = arith.constant 0 : index
    %1 = vector.load %arg2[%c0_1, %c0_2] : memref<128x128xf32, #tpu.memory_space<vmem>>, vector<128x128xf32>
    %cst = arith.constant dense<0.000000e+00> : vector<32x128xf32>
    %2 = tpu.matmul %0, %1, %cst {dimension_numbers = #tpu.dot_dimension_numbers<[1], [0], [0], [1], [0, 0, 1, 1], [], []>} : vector<32x128xf32>, vector<128x128xf32>, vector<32x128xf32> -> vector<32x128xf32>
    %c0_3 = arith.constant 0 : index
    %c0_4 = arith.constant 0 : index
    %3 = vector.load %arg3[%c0_3, %c0_4] : memref<1x128xf32, #tpu.memory_space<vmem>>, vector<1x128xf32>
    %4 = vector.broadcast %3 : vector<1x128xf32> to vector<32x128xf32>
    %5 = arith.addf %2, %4 : vector<32x128xf32>
    %cst_5 = arith.constant 0.000000e+00 : f32
    %6 = vector.broadcast %cst_5 : f32 to vector<32x128xf32>
    %7 = arith.maximumf %5, %6 : vector<32x128xf32>
    %c0_6 = arith.constant 0 : index
    %c0_7 = arith.constant 0 : index
    %8 = vector.load %arg4[%c0_6, %c0_7] : memref<32x128xf32, #tpu.memory_space<vmem>>, vector<32x128xf32>
    tpu.vector_store %arg4[%c0_6, %c0_7], %7 {strides = array<i32>} : memref<32x128xf32, #tpu.memory_space<vmem>>, vector<32x128xf32>,
    return
  }
  func.func @transform_0(%arg0: i32) -> (i32, i32) {
    %c0_i32 = arith.constant 0 : i32
    %c0_i32_0 = arith.constant 0 : i32
    return %arg0, %c0_i32 : i32, i32
  }
  func.func @transform_1(%arg0: i32) -> (i32, i32) {
    %c0_i32 = arith.constant 0 : i32
    %c0_i32_0 = arith.constant 0 : i32
    %c0_i32_1 = arith.constant 0 : i32
    return %c0_i32, %c0_i32_0 : i32, i32
  }
  func.func @transform_2(%arg0: i32) -> (i32, i32) {
    %c0_i32 = arith.constant 0 : i32
    %c0_i32_0 = arith.constant 0 : i32
    %c0_i32_1 = arith.constant 0 : i32
    return %c0_i32, %c0_i32_0 : i32, i32
  }
  func.func @transform_3(%arg0: i32) -> (i32, i32) {
    %c0_i32 = arith.constant 0 : i32
    %c0_i32_0 = arith.constant 0 : i32
    return %arg0, %c0_i32 : i32, i32
  }
}

</mosaic_0001>

<llo_original>
// kernel: tpu_custom_call.1
$region0: #{tpu_custom_call.1}
  #allocation0 [shape = 'u32[]', space=smem, size = 0x4, offset = 0x4, fixed_abs, tag = 'smem constant byte address 0x4 - core index']
  #allocation1 [shape = 'u32[144,128]{1,0:T(1,128)}', space=vmem, size = 0x12000, scoped, tag = 'internal scratch']
  %s0 = inlined_call_operand.hbm [shape: f32[128,128], index: 0, kind: input, shape index: {}]
  %s1 = inlined_call_operand.hbm [shape: f32[128,128], index: 1, kind: input, shape index: {}]
  %s2 = inlined_call_operand.vmem [shape: f32[1,128], index: 2, kind: input, shape index: {}]
  %s3 = inlined_call_operand.hbm [shape: f32[128,128], index: 3, kind: output, shape index: {}]
  %s4 = sld [smem:[#allocation0]]
  $region53: #{tpu_custom_call.1} parent=0
    _
  %s6 = ssub.s32 1, %s4
  %s7 = scalar_select 0, %s6, %s4
  $region1: #{tpu_custom_call.1} parent=0
    #allocation2 [shape = 'u8[32768]{0}', space=vmem, size = 0x8000, scoped, tag = 'input window, operand 0']
    #allocation3 [shape = 's32[2]{0}', space=sflag, size = 0x8, scoped, tag = 'scoped memory for tpu_custom_call.1']
    #allocation4 [shape = 's32[2]{0}', space=sflag, size = 0x8, scoped, tag = 'scoped memory for tpu_custom_call.1']
    #allocation5 [shape = 'u8[65536]{0}', space=vmem, size = 0x10000, scoped, tag = 'input window, operand 1, single buffered']
    #allocation6 [shape = 's32[1]{0}', space=sflag, size = 0x4, scoped, tag = 'scoped memory for tpu_custom_call.1']
    #allocation7 [shape = 'u8[32768]{0}', space=vmem, size = 0x8000, scoped, tag = 'output window, operand 0']
    %8 = vsyncpa [#allocation3], 0
    %s9 = scalar_lea.sflag [#allocation3], 1
    %10 = vsyncpa %s9, 0
    %11 = vsyncpa [#allocation6], 0
    %12 = vsyncpa [#allocation4], 0
    %s13 = scalar_lea.sflag [#allocation4], 1
    %14 = vsyncpa %s13, 0
    loop: start=0, step=1, limit=6
    $region2: #{tpu_custom_call.1} parent=1 // loop_pre_header
      _
    $region3: #{tpu_custom_call.1} parent=1 // loop_header
      %s16 = sphi 0, %s20
      %p17 = scmp.ge.s32.totalorder %s16, 6
      %s26 = sphi 0, %s28
      %s29 = sphi 0, %s26
      %s30 = sphi 0, %s29
      %s46 = sphi 0, %s30
      %s50 = sphi 0, %s50
      %s52 = sphi 0, %s50
      %s53 = sphi 0, %s52
      %s67 = sphi 0, %s53
      %s71 = sphi 0, %s71
      %s73 = sphi 0, %s71
      %s74 = sphi 0, %s73
      %s88 = sphi 0, %s74
      %s94 = sphi 0, %s96
      %s97 = sphi 0, %s94
      %s98 = sphi 0, %s97
      %s114 = sphi 0, %s98
    $region4: #{tpu_custom_call.1} parent=1 // loop_header_branch
      %19 = sbr.rel (%p17) target = $region8
    $region5: #{tpu_custom_call.1} parent=1 // loop_body
      %s21 = ssub.s32 %s16, 1
      %s22 = ssub.s32 %s16, 2
      %s23 = sadd.s32 %s16, 1
      %s24 = ssub.s32 %s16, %s23
      %p25 = scmp.eq.s32.totalorder %s24, 0
      %s27 = sadd.s32 %s26, 1
      %s28 = scalar_select %p25, %s26, %s27
      %p31 = pneg %p25
      %p32 = scmp.eq.s32.totalorder %s16, 3
      %p33 = por %p31, %p32
      %p34 = scmp.ne.s32.totalorder %s26, %s29
      %p35 = scmp.eq.s32.totalorder %s16, 0
      %p36 = por %p34, %p35
      %p37 = scmp.ne.s32.totalorder %s26, %s29
      %p38 = scmp.eq.s32.totalorder %s21, 3
      %p39 = por %p37, %p38
      %p40 = scmp.ne.s32.totalorder %s29, %s30
      %p41 = scmp.eq.s32.totalorder %s21, 0
      %p42 = por %p40, %p41
      %p43 = scmp.ne.s32.totalorder %s29, %s30
      %p44 = scmp.eq.s32.totalorder %s22, 3
      %p45 = por %p43, %p44
      %p47 = scmp.ne.s32.totalorder %s30, %s46
      %p48 = scmp.eq.s32.totalorder %s22, 0
      %p49 = por %p47, %p48
      %s51 = sadd.s32 %s50, 1
      %p54 = scmp.eq.s32.totalorder %s16, 3
      %p55 = scmp.ne.s32.totalorder %s50, %s52
      %p56 = scmp.eq.s32.totalorder %s16, 0
      %p57 = por %p55, %p56
      %p58 = scmp.ne.s32.totalorder %s50, %s52
      %p59 = scmp.eq.s32.totalorder %s21, 3
      %p60 = por %p58, %p59
      %p61 = scmp.ne.s32.totalorder %s52, %s53
      %p62 = scmp.eq.s32.totalorder %s21, 0
      %p63 = por %p61, %p62
      %p64 = scmp.ne.s32.totalorder %s52, %s53
      %p65 = scmp.eq.s32.totalorder %s22, 3
      %p66 = por %p64, %p65
      %p68 = scmp.ne.s32.totalorder %s53, %s67
      %p69 = scmp.eq.s32.totalorder %s22, 0
      %p70 = por %p68, %p69
      %s72 = sadd.s32 %s71, 1
      %p75 = scmp.eq.s32.totalorder %s16, 3
      %p76 = scmp.ne.s32.totalorder %s71, %s73
      %p77 = scmp.eq.s32.totalorder %s16, 0
      %p78 = por %p76, %p77
      %p79 = scmp.ne.s32.totalorder %s71, %s73
      %p80 = scmp.eq.s32.totalorder %s21, 3
      %p81 = por %p79, %p80
      %p82 = scmp.ne.s32.totalorder %s73, %s74
      %p83 = scmp.eq.s32.totalorder %s21, 0
      %p84 = por %p82, %p83
      %p85 = scmp.ne.s32.totalorder %s73, %s74
      %p86 = scmp.eq.s32.totalorder %s22, 3
      %p87 = por %p85, %p86
      %p89 = scmp.ne.s32.totalorder %s74, %s88
      %p90 = scmp.eq.s32.totalorder %s22, 0
      %p91 = por %p89, %p90
      %s92 = ssub.s32 %s16, %s23
      %p93 = scmp.eq.s32.totalorder %s92, 0
      %s95 = sadd.s32 %s94, 1
      %s96 = scalar_select %p93, %s94, %s95
      %p99 = pneg %p93
      %p100 = scmp.eq.s32.totalorder %s16, 3
      %p101 = por %p99, %p100
      %p102 = scmp.ne.s32.totalorder %s94, %s97
      %p103 = scmp.eq.s32.totalorder %s16, 0
      %p104 = por %p102, %p103
      %p105 = scmp.ne.s32.totalorder %s94, %s97
      %p106 = scmp.eq.s32.totalorder %s21, 3
      %p107 = por %p105, %p106
      %p108 = scmp.ne.s32.totalorder %s97, %s98
      %p109 = scmp.eq.s32.totalorder %s21, 0
      %p110 = por %p108, %p109
      %p111 = scmp.ne.s32.totalorder %s97, %s98
      %p112 = scmp.eq.s32.totalorder %s22, 3
      %p113 = por %p111, %p112
      %p115 = scmp.ne.s32.totalorder %s98, %s114
      %p116 = scmp.eq.s32.totalorder %s22, 0
      %p117 = por %p115, %p116
      %p118 = scmp.le.s32.totalorder 1, %s16
      %p119 = scmp.lt.s32.totalorder %s16, 5
      %p120 = pnand %p118, %p119
      %p121 = pneg %p120
      // Predicated region
      $region9: #{tpu_custom_call.1} parent=5 // pred_check
        _
      $region10: #{tpu_custom_call.1} parent=5 // pred_check_branch
        %123 = sbr.rel (%p120) target = $region12
      $region11: #{tpu_custom_call.1} parent=5 // pred_region
        %s124 = ssub.s32 %s16, 1
        // Predicated region
        $region13: #{tpu_custom_call.1} parent=11 // pred_check
          %p125 = pneg %p63
        $region14: #{tpu_custom_call.1} parent=11 // pred_check_branch
          %127 = sbr.rel (%p125) target = $region16
        $region15: #{tpu_custom_call.1} parent=11 // pred_region
          %s129 = ssub.s32 2048, 2048
          %130 = vsyncadd [#allocation6], %s129
          %s131 = sshll.u32 [#allocation5], 4
          %s132 = int_to_ptr.vmem [resolvable:$true] %s131
          %137 = dma.hbm_to_vmem [thread:$0]  %s1, 2048, %s132, [#allocation6], 128, 128, 8
        $region16: #{tpu_custom_call.1} parent=11 // pred_fallthru
          _
        // Predicated region
        $region17: #{tpu_custom_call.1} parent=11 // pred_check
          %p138 = pneg %p84
        $region18: #{tpu_custom_call.1} parent=11 // pred_check_branch
          %140 = sbr.rel (%p138) target = $region20
        $region19: #{tpu_custom_call.1} parent=11 // pred_region
          _
        $region20: #{tpu_custom_call.1} parent=11 // pred_fallthru
          _
      $region12: #{tpu_custom_call.1} parent=5 // pred_fallthru
        _
      %p141 = scmp.lt.s32.totalorder %s16, 4
      // Predicated region
      $region21: #{tpu_custom_call.1} parent=5 // pred_check
        %p142 = pneg %p141
      $region22: #{tpu_custom_call.1} parent=5 // pred_check_branch
        %144 = sbr.rel (%p142) target = $region24
      $region23: #{tpu_custom_call.1} parent=5 // pred_region
        // Predicated region
        $region25: #{tpu_custom_call.1} parent=23 // pred_check
          %p145 = pneg %p36
        $region26: #{tpu_custom_call.1} parent=23 // pred_check_branch
          %147 = sbr.rel (%p145) target = $region28
        $region27: #{tpu_custom_call.1} parent=23 // pred_region
          %s148 = sand.u32 %s26, 1
          %s149 = scalar_lea.sflag [#allocation3], %s148
          %s150 = sand.u32 %s26, 1
          %s151 = smul.addr %s150, 32
          %s152 = scalar_lea.vmem [#allocation2], %s151
          %s153 = smul.u32 4, %s16
          %s155 = ssub.s32 512, 512
          %156 = vsyncadd %s149, %s155
          %s157 = smul.addr %s153, 128
          %s158 = scalar_lea.hbm %s0, %s157
          %s159 = sshll.u32 %s152, 4
          %s160 = int_to_ptr.vmem [resolvable:$true] %s159
          %165 = dma.hbm_to_vmem [thread:$0]  %s158, 512, %s160, %s149, 128, 128, 8
        $region28: #{tpu_custom_call.1} parent=23 // pred_fallthru
          _
      $region24: #{tpu_custom_call.1} parent=5 // pred_fallthru
        _
      %p166 = scmp.le.s32.totalorder 1, %s16
      %p167 = scmp.lt.s32.totalorder %s16, 5
      %p168 = pnand %p166, %p167
      %p169 = pneg %p168
      // Predicated region
      $region29: #{tpu_custom_call.1} parent=5 // pred_check
        _
      $region30: #{tpu_custom_call.1} parent=5 // pred_check_branch
        %171 = sbr.rel (%p168) target = $region32
      $region31: #{tpu_custom_call.1} parent=5 // pred_region
        %s172 = ssub.s32 %s16, 1
        %s173 = sand.u32 %s29, 1
        %s174 = scalar_lea.sflag [#allocation3], %s173
        %s175 = sand.u32 %s29, 1
        %s176 = smul.addr %s175, 32
        %s177 = scalar_lea.vmem [#allocation2], %s176
        // Predicated region
        $region33: #{tpu_custom_call.1} parent=31 // pred_check
          %p178 = pneg %p42
        $region34: #{tpu_custom_call.1} parent=31 // pred_check_branch
          %180 = sbr.rel (%p178) target = $region36
        $region35: #{tpu_custom_call.1} parent=31 // pred_region
          %181 = dma.done %s174, 512
        $region36: #{tpu_custom_call.1} parent=31 // pred_fallthru
          _
        // Predicated region
        $region37: #{tpu_custom_call.1} parent=31 // pred_check
          %p182 = pneg %p63
        $region38: #{tpu_custom_call.1} parent=31 // pred_check_branch
          %184 = sbr.rel (%p182) target = $region40
        $region39: #{tpu_custom_call.1} parent=31 // pred_region
          %185 = dma.done [#allocation6], 2048
        $region40: #{tpu_custom_call.1} parent=31 // pred_fallthru
          _
        %s186 = sand.u32 %s29, 1
        %s187 = scalar_lea.sflag [#allocation3], %s186
        %s188 = sand.u32 %s29, 1
        %s189 = smul.addr %s188, 32
        %s190 = scalar_lea.vmem [#allocation2], %s189
        %p191 = pneg %p42
        %p192 = pneg %p39
        %p193 = pneg %p63
        %p194 = pneg %p60
        %p195 = pneg %p84
        %p196 = pneg %p81
        %p197 = pneg %p110
        %p198 = pneg %p107
        %s199 = sand.u32 %s97, 1
        %s200 = scalar_lea.sflag [#allocation4], %s199
        %s201 = sand.u32 %s97, 1
        %s202 = smul.addr %s201, 32
        %s203 = scalar_lea.vmem [#allocation7], %s202
        %s204 = smul.u32 4, %s21
        %s205 = smul.u32 4, %s21
        %v206 = vld [vmem:[%s177] sm:$0xff]
        %v207 = vld [vmem:[%s177 + $0x8] sm:$0xff]
        %v208 = vld [vmem:[%s177 + $0x10] sm:$0xff]
        %v209 = vld [vmem:[%s177 + $0x18] sm:$0xff]
        %v210 = vld [vmem:[#allocation5] sm:$0xff]
        %v211 = vld [vmem:[#allocation5 + $0x8] sm:$0xff]
        %v212 = vld [vmem:[#allocation5 + $0x10] sm:$0xff]
        %v213 = vld [vmem:[#allocation5 + $0x18] sm:$0xff]
        %v214 = vld [vmem:[#allocation5 + $0x20] sm:$0xff]
        %v215 = vld [vmem:[#allocation5 + $0x28] sm:$0xff]
        %v216 = vld [vmem:[#allocation5 + $0x30] sm:$0xff]
        %v217 = vld [vmem:[#allocation5 + $0x38] sm:$0xff]
        %v218 = vld [vmem:[#allocation5 + $0x40] sm:$0xff]
        %v219 = vld [vmem:[#allocation5 + $0x48] sm:$0xff]
        %v220 = vld [vmem:[#allocation5 + $0x50] sm:$0xff]
        %v221 = vld [vmem:[#allocation5 + $0x58] sm:$0xff]
        %v222 = vld [vmem:[#allocation5 + $0x60] sm:$0xff]
        %v223 = vld [vmem:[#allocation5 + $0x68] sm:$0xff]
        %v224 = vld [vmem:[#allocation5 + $0x70] sm:$0xff]
        %v225 = vld [vmem:[#allocation5 + $0x78] sm:$0xff]
        %v226 = vld [vmem:[%s2] sm:$0x1]
        %v228 = vlaneseq
        %v229 = vshrl.u32 %v228, 7
        %v230 = vsub.s32 0, %v229
        %v231 = vrot.slane %v226, %v230
        %233 = vmatprep.subr.mxu0 0.0
        %234 = vmatpush1.msra.mxu0 %v225
        %235 = vmatprep.subr.mxu0 0.0
        %236 = vmatpush1.msra.mxu0 %v224
        %237 = vmatprep.subr.mxu0 0.0
        %238 = vmatpush1.msra.mxu0 %v223
        %239 = vmatprep.subr.mxu0 0.0
        %240 = vmatpush1.msra.mxu0 %v222
        %241 = vmatprep.subr.mxu0 0.0
        %242 = vmatpush1.msra.mxu0 %v221
        %243 = vmatprep.subr.mxu0 0.0
        %244 = vmatpush1.msra.mxu0 %v220
        %245 = vmatprep.subr.mxu0 0.0
        %246 = vmatpush1.msra.mxu0 %v219
        %247 = vmatprep.subr.mxu0 0.0
        %248 = vmatpush1.msra.mxu0 %v218
        %249 = vmatprep.subr.mxu0 0.0
        %250 = vmatpush1.msra.mxu0 %v217
        %251 = vmatprep.subr.mxu0 0.0
        %252 = vmatpush1.msra.mxu0 %v216
        %253 = vmatprep.subr.mxu0 0.0
        %254 = vmatpush1.msra.mxu0 %v215
        %255 = vmatprep.subr.mxu0 0.0
        %256 = vmatpush1.msra.mxu0 %v214
        %257 = vmatprep.subr.mxu0 0.0
        %258 = vmatpush1.msra.mxu0 %v213
        %259 = vmatprep.subr.mxu0 0.0
        %260 = vmatpush1.msra.mxu0 %v212
        %261 = vmatprep.subr.mxu0 0.0
        %262 = vmatpush1.msra.mxu0 %v211
        %263 = vmatprep.subr.mxu0 0.0
        %264 = vmatpush1.msra.mxu0 %v210
        %265 = vmatprep.subr.mxu0 0.0
        %266 = vmatpush2.msra.mxu0 0.0
        %267 = vmatprep.subr.mxu0 0.0
        %268 = vmatpush2.msra.mxu0 0.0
        %269 = vmatprep.subr.mxu0 0.0
        %270 = vmatpush2.msra.mxu0 0.0
        %271 = vmatprep.subr.mxu0 0.0
        %272 = vmatpush2.msra.mxu0 0.0
        %273 = vmatprep.subr.mxu0 0.0
        %274 = vmatpush2.msra.mxu0 0.0
        %275 = vmatprep.subr.mxu0 0.0
        %276 = vmatpush2.msra.mxu0 0.0
        %277 = vmatprep.subr.mxu0 0.0
        %278 = vmatpush2.msra.mxu0 0.0
        %279 = vmatprep.subr.mxu0 0.0
        %280 = vmatpush2.msra.mxu0 0.0
        %281 = vmatprep.subr.mxu0 0.0
        %282 = vmatpush2.msra.mxu0 0.0
        %283 = vmatprep.subr.mxu0 0.0
        %284 = vmatpush2.msra.mxu0 0.0
        %285 = vmatprep.subr.mxu0 0.0
        %286 = vmatpush2.msra.mxu0 0.0
        %287 = vmatprep.subr.mxu0 0.0
        %288 = vmatpush2.msra.mxu0 0.0
        %289 = vmatprep.subr.mxu0 0.0
        %290 = vmatpush2.msra.mxu0 0.0
        %291 = vmatprep.subr.mxu0 0.0
        %292 = vmatpush2.msra.mxu0 0.0
        %293 = vmatprep.subr.mxu0 0.0
        %294 = vmatpush2.msra.mxu0 0.0
        %295 = vmatprep.subr.mxu0 0.0
        %296 = vmatpush2.msra.mxu0 0.0
        %297 = vmatprep.mubr.f32.mxu0 0.0
        %298 = vmatmul.mubr.f32.gmra.mxu0 %v206
        %v299 = vpop.f32.mrf.mxu0
        %v300 = vadd.f32 %v231, %v299
        %v301 = vpop.f32.mrf.mxu0
        %302 = vmatprep.mubr.f32.mxu0 0.0
        %303 = vmatmul.mubr.f32.gmra.mxu0 %v207
        %v304 = vpop.f32.mrf.mxu0
        %v305 = vadd.f32 %v231, %v304
        %v306 = vpop.f32.mrf.mxu0
        %307 = vmatprep.mubr.f32.mxu0 0.0
        %308 = vmatmul.mubr.f32.gmra.mxu0 %v208
        %v309 = vpop.f32.mrf.mxu0
        %v310 = vadd.f32 %v231, %v309
        %v311 = vpop.f32.mrf.mxu0
        %312 = vmatprep.mubr.f32.mxu0 0.0
        %313 = vmatmul.mubr.f32.gmra.mxu0 %v209
        %v314 = vpop.f32.mrf.mxu0
        %v315 = vadd.f32 %v231, %v314
        %v316 = vpop.f32.mrf.mxu0
        %317 = vdwg.mxu0
        %v318 = vmax.f32 %v300, 0.0
        %v319 = vmax.f32 %v305, 0.0
        %v320 = vmax.f32 %v310, 0.0
        %v321 = vmax.f32 %v315, 0.0
        %322 = vst [vmem:[%s203] sm:$0xff] %v318
        %323 = vst [vmem:[%s203 + $0x8] sm:$0xff] %v319
        %324 = vst [vmem:[%s203 + $0x10] sm:$0xff] %v320
        %325 = vst [vmem:[%s203 + $0x18] sm:$0xff] %v321
        %s326 = sand.u32 %s97, 1
        %s327 = scalar_lea.sflag [#allocation4], %s326
        %s328 = sand.u32 %s97, 1
        %s329 = smul.addr %s328, 32
        %s330 = scalar_lea.vmem [#allocation7], %s329
        // Predicated region
        $region41: #{tpu_custom_call.1} parent=31 // pred_check
          %p331 = pneg %p107
        $region42: #{tpu_custom_call.1} parent=31 // pred_check_branch
          %333 = sbr.rel (%p331) target = $region44
        $region43: #{tpu_custom_call.1} parent=31 // pred_region
          %s334 = smul.u32 4, %s21
          %s336 = ssub.s32 512, 512
          %337 = vsyncadd %s327, %s336
          %s338 = smul.addr %s334, 128
          %s339 = scalar_lea.hbm %s3, %s338
          %s340 = sshll.u32 %s330, 4
          %s341 = int_to_ptr.vmem [resolvable:$true] %s340
          %346 = dma.vmem_to_hbm [thread:$0]  %s341, 512, %s339, %s327, 128, 128, 8
        $region44: #{tpu_custom_call.1} parent=31 // pred_fallthru
          _
      $region32: #{tpu_custom_call.1} parent=5 // pred_fallthru
        _
      %p347 = scmp.le.s32.totalorder 2, %s16
      // Predicated region
      $region45: #{tpu_custom_call.1} parent=5 // pred_check
        %p348 = pneg %p347
      $region46: #{tpu_custom_call.1} parent=5 // pred_check_branch
        %350 = sbr.rel (%p348) target = $region48
      $region47: #{tpu_custom_call.1} parent=5 // pred_region
        %s351 = ssub.s32 %s16, 2
        // Predicated region
        $region49: #{tpu_custom_call.1} parent=47 // pred_check
          %p352 = pneg %p113
        $region50: #{tpu_custom_call.1} parent=47 // pred_check_branch
          %354 = sbr.rel (%p352) target = $region52
        $region51: #{tpu_custom_call.1} parent=47 // pred_region
          %s355 = sand.u32 %s98, 1
          %s356 = scalar_lea.sflag [#allocation4], %s355
          %s357 = sand.u32 %s98, 1
          %s358 = smul.addr %s357, 32
          %s359 = scalar_lea.vmem [#allocation7], %s358
          %360 = dma.done %s356, 512
        $region52: #{tpu_custom_call.1} parent=47 // pred_fallthru
          _
      $region48: #{tpu_custom_call.1} parent=5 // pred_fallthru
        _
    $region6: #{tpu_custom_call.1} parent=1 // loop_footer
      %s20 = sadd.s32 1, %s16
    $region7: #{tpu_custom_call.1} parent=1 // loop_footer_branch
      %15 = sbr.rel target = $region3
    $region8: #{tpu_custom_call.1} parent=1 // loop_exit
      _
    %361 = vsyncpa [#allocation3], 1
    %s362 = scalar_lea.sflag [#allocation3], 1
    %363 = vsyncpa %s362, 1
    %364 = vsyncpa [#allocation6], 1
    %365 = vsyncpa [#allocation4], 1
    %s366 = scalar_lea.sflag [#allocation4], 1
    %367 = vsyncpa %s366, 1

</llo_original>
